<compile_context>
chip_gen: v7x
topology: tpu7x:2x2x1
jax: 0.10.0
libtpu: 0.0.40
codegen_flags: <defaults>
</compile_context>

<pallas_src>
import functools

import jax
import jax.numpy as jnp
from jax.experimental import pallas as pl
from jax.experimental.pallas import tpu as pltpu

_LANE = 128
_MAX_TIME_BLOCK = 2048      # keeps the in-kernel lane-tile fold unroll <= 16


def _round_up(x, m):
    return ((x + m - 1) // m) * m


def _sublane_pack(itemsize):
    return {4: 8, 2: 16, 1: 32}.get(int(itemsize), 8)


def _device_kind():
    try:
        return jax.devices()[0].device_kind.lower()
    except Exception:
        return ""


def _pick_time_block(length, cap_cols):
    """Largest multiple of 128 that divides `length` and is <= cap_cols."""
    k = length // _LANE
    best = 1
    d = 1
    while d * d <= k:
        if k % d == 0:
            for c in (d, k // d):
                if _LANE * c <= cap_cols:
                    best = max(best, c)
        d += 1
    return _LANE * best


def _fused_mse_kernel(dur_x_ref, dur_y_ref, mel_x_ref, mel_y_ref,
                      dur_sse_ref, mel_sse_ref, acc_ref,
                      *, use_cols, row_block, n_rows, n_row_inner,
                      need_row_mask, first_masked_blk):
    o = pl.program_id(0)          # "parallel" split (2 TCs on v7x, else 1)
    i = pl.program_id(1)          # row-block reduction
    t = pl.program_id(2)          # time-block reduction

    first = (i == 0) & (t == 0)
    last = (i == pl.num_programs(1) - 1) & (t == pl.num_programs(2) - 1)

    @pl.when(first)
    def _init():
        dur_sse_ref[...] = jnp.zeros_like(dur_sse_ref)
        mel_sse_ref[...] = jnp.zeros_like(mel_sse_ref)
        acc_ref[...] = jnp.zeros_like(acc_ref)

    @pl.when(first & (o == 0))
    def _duration():
        dd = (dur_x_ref[...].astype(jnp.float32)
              - dur_y_ref[...].astype(jnp.float32))
        dur_sse_ref[...] += jnp.sum(dd * dd)

    # Tiles carry exactly the needed columns on the 128-tiled path; only the
    # single-time-block fallback (L % 128 != 0) slices the longer tensor.
    mx = (mel_x_ref[...] if mel_x_ref.shape[-1] == use_cols
          else mel_x_ref[:, :use_cols])
    my = (mel_y_ref[...] if mel_y_ref.shape[-1] == use_cols
          else mel_y_ref[:, :use_cols])
    d = mx.astype(jnp.float32) - my.astype(jnp.float32)
    sq = d * d

    acc_cols = acc_ref.shape[-1]

    def _fold(vals):
        # Pure-VPU: fold aligned lane tiles, accumulate into persistent scratch.
        part = vals[:, :acc_cols]
        for c in range(acc_cols, use_cols, acc_cols):
            part = part + vals[:, c:c + acc_cols]
        acc_ref[...] += part

    if need_row_mask:
        blk = o * n_row_inner + i            # unclamped logical row block
        is_ragged = blk >= first_masked_blk

        @pl.when(jnp.logical_not(is_ragged))
        def _fast():
            _fold(sq)

        @pl.when(is_ragged)
        def _masked():
            rid = (jax.lax.broadcasted_iota(jnp.int32, sq.shape, 0)
                   + blk * row_block)
            _fold(jnp.where(rid < n_rows, sq, jnp.float32(0.0)))
    else:
        _fold(sq)

    @pl.when(last)
    def _finalize():
        mel_sse_ref[...] += jnp.sum(acc_ref[...])


def loss_forward(duration, duration_predict, melspec, melspec_predict):
    """Pallas equivalent of Loss.forward (returns a tuple of two scalars)."""
    assert duration.shape == duration_predict.shape
    assert melspec.shape[:-1] == melspec_predict.shape[:-1]

    t_x = melspec.shape[-1]
    t_y = melspec_predict.shape[-1]
    length = min(t_x, t_y)
    n_dur = duration.size

    # Free, contiguous reshapes (merge leading dims); no pad / cast / slice.
    mel2 = melspec.reshape(-1, t_x)
    mel2_p = melspec_predict.reshape(-1, t_y)
    n_rows = mel2.shape[0]
    n_mel = n_rows * length

    if n_dur == 0 or n_mel == 0:
        # Degenerate empty shapes: plain JAX fallback (torch returns NaN here).
        len_loss = jnp.mean(jnp.square(duration.astype(jnp.float32)
                                       - duration_predict.astype(jnp.float32)))
        mel_loss = jnp.mean(jnp.square(mel2[:, :length].astype(jnp.float32)
                                       - mel2_p[:, :length].astype(jnp.float32)))
        return len_loss, mel_loss

    isx = mel2.dtype.itemsize
    isy = mel2_p.dtype.itemsize
    pack = max(_sublane_pack(isx), _sublane_pack(isy))

    kind = _device_kind()
    is_v5e = ("v5e" in kind) or ("v5 lite" in kind) or ("v5litepod" in kind)
    num_splits = 2 if "v7" in kind else 1            # 2 TCs only on v7x
    target_bytes = (1 << 20) if is_v5e else (2 << 20)

    if length % _LANE == 0:
        # Lane-aligned time blocking that tiles L exactly: read only the bytes
        # used, unmasked full-width loads, no in-kernel slice.
        budget_cols = (target_bytes // max(1, pack * max(isx, isy)))
        budget_cols = max(_LANE, (budget_cols // _LANE) * _LANE)
        cap_cols = max(_LANE, min(length, _MAX_TIME_BLOCK, budget_cols))
        time_block = _pick_time_block(length, cap_cols)
        tbx = tby = time_block
        n_tb = length // time_block
        use_cols = time_block
    else:
        # Fallback: one time block per tensor; never larger than the tensor.
        l_pad = _round_up(length, _LANE)
        tbx = l_pad if l_pad <= t_x else t_x
        tby = l_pad if l_pad <= t_y else t_y
        n_tb = 1
        use_cols = length

    max_row_bytes = max(tbx * isx, tby * isy)
    row_block = max(pack, ((target_bytes // max(1, max_row_bytes)) // pack) * pack)
    if row_block >= n_rows:
        row_block = n_rows          # full-dim block: legal, no ragged rows

    n_rb = pl.cdiv(n_rows, row_block)
    num_splits = max(1, min(num_splits, n_rb))
    n_row_inner = pl.cdiv(n_rb, num_splits)
    need_row_mask = (n_rows % row_block != 0) or (num_splits * n_row_inner > n_rb)
    first_masked_blk = n_rows // row_block
    last_blk = n_rb - 1

    acc_cols = _LANE if use_cols % _LANE == 0 else use_cols

    def mel_map(o, i, t):
        return (jnp.minimum(o * n_row_inner + i, last_blk), t)

    def dur_map(o, i, t, _nd=duration.ndim):
        return (0,) * _nd                         # whole array, fetched once

    out_map = lambda o, i, t: (0, o)

    kernel = functools.partial(
        _fused_mse_kernel,
        use_cols=use_cols, row_block=row_block, n_rows=n_rows,
        n_row_inner=n_row_inner, need_row_mask=need_row_mask,
        first_masked_blk=first_masked_blk)

    out_cols = _LANE * num_splits

    # VMEM budget (2 inputs x 2 pipeline buffers + accumulator + misc).
    blk_x_bytes = row_block * tbx * isx
    blk_y_bytes = row_block * tby * isy
    acc_bytes = row_block * acc_cols * 4
    dur_bytes = (duration.size * duration.dtype.itemsize
                 + duration_predict.size * duration_predict.dtype.itemsize)
    vmem_need = 2 * (blk_x_bytes + blk_y_bytes) + acc_bytes + 4 * dur_bytes + (1 << 16)
    vmem_limit = int(min(48 << 20, max(24 << 20, (vmem_need * 3) // 2 + (4 << 20))))

    bytes_accessed = int(n_rows * n_tb * (tbx * isx + tby * isy)
                         + dur_bytes + 2 * out_cols * 4)
    cost = pl.CostEstimate(flops=int(3 * n_mel + 3 * n_dur),
                           transcendentals=0,
                           bytes_accessed=bytes_accessed)

    dur_sse, mel_sse = pl.pallas_call(
        kernel,
        out_shape=(jax.ShapeDtypeStruct((1, out_cols), jnp.float32),
                   jax.ShapeDtypeStruct((1, out_cols), jnp.float32)),
        grid_spec=pltpu.PrefetchScalarGridSpec(
            num_scalar_prefetch=0,
            grid=(num_splits, n_row_inner, n_tb),
            in_specs=[
                pl.BlockSpec(duration.shape, dur_map),
                pl.BlockSpec(duration_predict.shape, dur_map),
                pl.BlockSpec((row_block, tbx), mel_map),
                pl.BlockSpec((row_block, tby), mel_map),
            ],
            out_specs=(
                pl.BlockSpec((1, _LANE), out_map),
                pl.BlockSpec((1, _LANE), out_map),
            ),
            scratch_shapes=[pltpu.VMEM((row_block, acc_cols), jnp.float32)],
        ),
        compiler_params=pltpu.CompilerParams(
            dimension_semantics=("parallel", "arbitrary", "arbitrary"),
            vmem_limit_bytes=vmem_limit),
        cost_estimate=cost,
    )(duration, duration_predict, mel2, mel2_p)

    # Each (1,128) per-split block holds its partial sum broadcast across lanes.
    dur_total = dur_sse.reshape(num_splits, _LANE)[0, 0]
    mel_total = jnp.sum(mel_sse.reshape(num_splits, _LANE)[:, 0])
    len_loss = dur_total / jnp.float32(n_dur)
    mel_loss = mel_total / jnp.float32(n_mel)
    return len_loss, mel_loss


if __name__ == "__main__":
    key = jax.random.PRNGKey(0)
    k1, k2, k3, k4 = jax.random.split(key, 4)

    B, S = 2, 8              # batch, sequence length (durations)
    N_MELS = 16              # mel channels
    T_TRUE, T_PRED = 20, 24  # mismatched time axes -> slice to min = 20

    duration = jax.random.normal(k1, (B, S), dtype=jnp.float32)
    duration_predict = jax.random.normal(k2, (B, S), dtype=jnp.float32)
    melspec = jax.random.normal(k3, (B, N_MELS, T_TRUE), dtype=jnp.float32)
    melspec_predict = jax.random.normal(k4, (B, N_MELS, T_PRED), dtype=jnp.float32)

    len_loss, mel_loss = loss_forward(duration, duration_predict,
                                      melspec, melspec_predict)
    jax.block_until_ready((len_loss, mel_loss))

    # Pure-JAX reference (same semantics as torch.nn.MSELoss 'mean').
    ref_len = jnp.mean((duration - duration_predict) ** 2)
    L = min(melspec.shape[-1], melspec_predict.shape[-1])
    ref_mel = jnp.mean((melspec[:, :, :L] - melspec_predict[:, :, :L]) ** 2)
    assert jnp.allclose(len_loss, ref_len, rtol=1e-5, atol=1e-6), (len_loss, ref_len)
    assert jnp.allclose(mel_loss, ref_mel, rtol=1e-5, atol=1e-6), (mel_loss, ref_mel)

    print("KERNEL_OK")
</pallas_src>

<mosaic_0001>
module attributes {stable_mosaic.version = 11 : i64} {
  func.func @_fused_mse_kernel(%arg0: i32, %arg1: i32, %arg2: i32, %arg3: memref<2x8xf32, #tpu.memory_space<vmem>>, %arg4: memref<2x8xf32, #tpu.memory_space<vmem>>, %arg5: memref<32x20xf32, #tpu.memory_space<vmem>>, %arg6: memref<32x24xf32, #tpu.memory_space<vmem>>, %arg7: memref<1x128xf32, #tpu.memory_space<vmem>>, %arg8: memref<1x128xf32, #tpu.memory_space<vmem>>, %arg9: memref<32x20xf32, #tpu.memory_space<vmem>>) attributes {dimension_semantics = [#tpu.dimension_semantics<parallel>, #tpu.dimension_semantics<arbitrary>, #tpu.dimension_semantics<arbitrary>], iteration_bounds = array<i64: 1, 1, 1>, scalar_prefetch = 0 : i64, scratch_operands = 1 : i64, tpu.core_type = #tpu.core_type<tc>, window_params = [{pipeline_mode = #tpu.pipeline_mode<synchronous>, transform_indices = @transform_0, window_bounds = array<i64: 2, 8>}, {pipeline_mode = #tpu.pipeline_mode<synchronous>, transform_indices = @transform_1, window_bounds = array<i64: 2, 8>}, {transform_indices = @transform_2, window_bounds = array<i64: 32, 20>}, {transform_indices = @transform_3, window_bounds = array<i64: 32, 24>}, {transform_indices = @transform_4, window_bounds = array<i64: 1, 128>}, {transform_indices = @transform_5, window_bounds = array<i64: 1, 128>}]} {
    %c0_i32 = arith.constant 0 : i32
    %0 = arith.cmpi eq, %arg1, %c0_i32 : i32
    %c0_i32_0 = arith.constant 0 : i32
    %1 = arith.cmpi eq, %arg2, %c0_i32_0 : i32
    %2 = arith.andi %0, %1 : i1
    %c0_i32_1 = arith.constant 0 : i32
    %3 = arith.cmpi eq, %arg1, %c0_i32_1 : i32
    %c0_i32_2 = arith.constant 0 : i32
    %4 = arith.cmpi eq, %arg2, %c0_i32_2 : i32
    %5 = arith.andi %3, %4 : i1
    %6 = arith.extui %2 : i1 to i32
    %c0_i32_3 = arith.constant 0 : i32
    %7 = arith.cmpi ne, %6, %c0_i32_3 : i32
    scf.if %7 {
      %cst = arith.constant 0.000000e+00 : f32
      %21 = vector.broadcast %cst : f32 to vector<1x128xf32>
      %c0_14 = arith.constant 0 : index
      %c0_15 = arith.constant 0 : index
      %22 = vector.load %arg7[%c0_14, %c0_15] : memref<1x128xf32, #tpu.memory_space<vmem>>, vector<1x128xf32>
      tpu.vector_store %arg7[%c0_14, %c0_15], %21 {strides = array<i32>} : memref<1x128xf32, #tpu.memory_space<vmem>>, vector<1x128xf32>,
      %cst_16 = arith.constant 0.000000e+00 : f32
      %23 = vector.broadcast %cst_16 : f32 to vector<1x128xf32>
      %c0_17 = arith.constant 0 : index
      %c0_18 = arith.constant 0 : index
      %24 = vector.load %arg8[%c0_17, %c0_18] : memref<1x128xf32, #tpu.memory_space<vmem>>, vector<1x128xf32>
      tpu.vector_store %arg8[%c0_17, %c0_18], %23 {strides = array<i32>} : memref<1x128xf32, #tpu.memory_space<vmem>>, vector<1x128xf32>,
      %cst_19 = arith.constant 0.000000e+00 : f32
      %25 = vector.broadcast %cst_19 : f32 to vector<32x20xf32>
      %c0_20 = arith.constant 0 : index
      %c0_21 = arith.constant 0 : index
      %26 = vector.load %arg9[%c0_20, %c0_21] : memref<32x20xf32, #tpu.memory_space<vmem>>, vector<32x20xf32>
      tpu.vector_store %arg9[%c0_20, %c0_21], %25 {strides = array<i32>} : memref<32x20xf32, #tpu.memory_space<vmem>>, vector<32x20xf32>,
    } else {
    }
    %c0_i32_4 = arith.constant 0 : i32
    %8 = arith.cmpi eq, %arg0, %c0_i32_4 : i32
    %9 = arith.andi %2, %8 : i1
    %10 = arith.extui %9 : i1 to i32
    %c0_i32_5 = arith.constant 0 : i32
    %11 = arith.cmpi ne, %10, %c0_i32_5 : i32
    scf.if %11 {
      %c0_14 = arith.constant 0 : index
      %c0_15 = arith.constant 0 : index
      %21 = vector.load %arg3[%c0_14, %c0_15] : memref<2x8xf32, #tpu.memory_space<vmem>>, vector<2x8xf32>
      %c0_16 = arith.constant 0 : index
      %c0_17 = arith.constant 0 : index
      %22 = vector.load %arg4[%c0_16, %c0_17] : memref<2x8xf32, #tpu.memory_space<vmem>>, vector<2x8xf32>
      %23 = arith.subf %21, %22 : vector<2x8xf32>
      %c0_18 = arith.constant 0 : index
      %c0_19 = arith.constant 0 : index
      %24 = vector.load %arg7[%c0_18, %c0_19] : memref<1x128xf32, #tpu.memory_space<vmem>>, vector<1x128xf32>
      %25 = arith.mulf %23, %23 : vector<2x8xf32>
      %26 = vector.shape_cast %25 : vector<2x8xf32> to vector<1x2x8xf32>
      %cst = arith.constant dense<0.000000e+00> : vector<1xf32>
      %27 = vector.multi_reduction <add>, %26, %cst [1, 2] : vector<1x2x8xf32> to vector<1xf32>
      %28 = vector.shape_cast %27 : vector<1xf32> to vector<1x1x1xf32>
      %29 = vector.extract %28[0, 0, 0] : f32 from vector<1x1x1xf32>
      %30 = vector.broadcast %29 : f32 to vector<1x128xf32>
      %31 = arith.addf %24, %30 : vector<1x128xf32>
      %c0_20 = arith.constant 0 : index
      %c0_21 = arith.constant 0 : index
      %32 = vector.load %arg7[%c0_20, %c0_21] : memref<1x128xf32, #tpu.memory_space<vmem>>, vector<1x128xf32>
      tpu.vector_store %arg7[%c0_20, %c0_21], %31 {strides = array<i32>} : memref<1x128xf32, #tpu.memory_space<vmem>>, vector<1x128xf32>,
    } else {
    }
    %c0 = arith.constant 0 : index
    %c0_6 = arith.constant 0 : index
    %12 = vector.load %arg5[%c0, %c0_6] : memref<32x20xf32, #tpu.memory_space<vmem>>, vector<32x20xf32>
    %c0_7 = arith.constant 0 : index
    %c0_8 = arith.constant 0 : index
    %13 = vector.load %arg6[%c0_7, %c0_8] : memref<32x24xf32, #tpu.memory_space<vmem>>, vector<32x20xf32>
    %14 = arith.subf %12, %13 : vector<32x20xf32>
    %15 = arith.mulf %14, %14 : vector<32x20xf32>
    %c0_9 = arith.constant 0 : index
    %c0_10 = arith.constant 0 : index
    %16 = vector.load %arg9[%c0_9, %c0_10] : memref<32x20xf32, #tpu.memory_space<vmem>>, vector<32x20xf32>
    %17 = arith.addf %16, %15 : vector<32x20xf32>
    %c0_11 = arith.constant 0 : index
    %c0_12 = arith.constant 0 : index
    %18 = vector.load %arg9[%c0_11, %c0_12] : memref<32x20xf32, #tpu.memory_space<vmem>>, vector<32x20xf32>
    tpu.vector_store %arg9[%c0_11, %c0_12], %17 {strides = array<i32>} : memref<32x20xf32, #tpu.memory_space<vmem>>, vector<32x20xf32>,
    %19 = arith.extui %5 : i1 to i32
    %c0_i32_13 = arith.constant 0 : i32
    %20 = arith.cmpi ne, %19, %c0_i32_13 : i32
    scf.if %20 {
      %c0_14 = arith.constant 0 : index
      %c0_15 = arith.constant 0 : index
      %21 = vector.load %arg8[%c0_14, %c0_15] : memref<1x128xf32, #tpu.memory_space<vmem>>, vector<1x128xf32>
      %c0_16 = arith.constant 0 : index
      %c0_17 = arith.constant 0 : index
      %22 = vector.load %arg9[%c0_16, %c0_17] : memref<32x20xf32, #tpu.memory_space<vmem>>, vector<32x20xf32>
      %23 = vector.shape_cast %22 : vector<32x20xf32> to vector<1x32x20xf32>
      %cst = arith.constant dense<0.000000e+00> : vector<1xf32>
      %24 = vector.multi_reduction <add>, %23, %cst [1, 2] : vector<1x32x20xf32> to vector<1xf32>
      %25 = vector.shape_cast %24 : vector<1xf32> to vector<1x1x1xf32>
      %26 = vector.extract %25[0, 0, 0] : f32 from vector<1x1x1xf32>
      %27 = vector.broadcast %26 : f32 to vector<1x128xf32>
      %28 = arith.addf %21, %27 : vector<1x128xf32>
      %c0_18 = arith.constant 0 : index
      %c0_19 = arith.constant 0 : index
      %29 = vector.load %arg8[%c0_18, %c0_19] : memref<1x128xf32, #tpu.memory_space<vmem>>, vector<1x128xf32>
      tpu.vector_store %arg8[%c0_18, %c0_19], %28 {strides = array<i32>} : memref<1x128xf32, #tpu.memory_space<vmem>>, vector<1x128xf32>,
    } else {
    }
    return
  }
  func.func @transform_0(%arg0: i32, %arg1: i32, %arg2: i32) -> (i32, i32) {
    %c0_i32 = arith.constant 0 : i32
    %c0_i32_0 = arith.constant 0 : i32
    %c0_i32_1 = arith.constant 0 : i32
    return %c0_i32, %c0_i32_0 : i32, i32
  }
  func.func @transform_1(%arg0: i32, %arg1: i32, %arg2: i32) -> (i32, i32) {
    %c0_i32 = arith.constant 0 : i32
    %c0_i32_0 = arith.constant 0 : i32
    %c0_i32_1 = arith.constant 0 : i32
    return %c0_i32, %c0_i32_0 : i32, i32
  }
  func.func @transform_2(%arg0: i32, %arg1: i32, %arg2: i32) -> (i32, i32) {
    %c1_i32 = arith.constant 1 : i32
    %0 = arith.muli %arg0, %c1_i32 : i32
    %1 = arith.addi %0, %arg1 : i32
    %c0_i32 = arith.constant 0 : i32
    %2 = arith.minsi %1, %c0_i32 : i32
    %c0_i32_0 = arith.constant 0 : i32
    return %2, %arg2 : i32, i32
  }
  func.func @transform_3(%arg0: i32, %arg1: i32, %arg2: i32) -> (i32, i32) {
    %c1_i32 = arith.constant 1 : i32
    %0 = arith.muli %arg0, %c1_i32 : i32
    %1 = arith.addi %0, %arg1 : i32
    %c0_i32 = arith.constant 0 : i32
    %2 = arith.minsi %1, %c0_i32 : i32
    %c0_i32_0 = arith.constant 0 : i32
    return %2, %arg2 : i32, i32
  }
  func.func @transform_4(%arg0: i32, %arg1: i32, %arg2: i32) -> (i32, i32) {
    %c0_i32 = arith.constant 0 : i32
    %c0_i32_0 = arith.constant 0 : i32
    return %c0_i32, %arg0 : i32, i32
  }
  func.func @transform_5(%arg0: i32, %arg1: i32, %arg2: i32) -> (i32, i32) {
    %c0_i32 = arith.constant 0 : i32
    %c0_i32_0 = arith.constant 0 : i32
    return %c0_i32, %arg0 : i32, i32
  }
}

</mosaic_0001>

<llo_original>
// kernel: tpu_custom_call.1
$region0: #{tpu_custom_call.1}
  #allocation0 [shape = 'u32[]', space=smem, size = 0x4, offset = 0x4, fixed_abs, tag = 'smem constant byte address 0x4 - core index']
  #allocation1 [shape = 'u32[144,128]{1,0:T(1,128)}', space=vmem, size = 0x12000, scoped, tag = 'internal scratch']
  #allocation2 [shape = 'f32[32,20]{1,0:T(8,128)}', space=vmem, size = 0x4000, scoped, tag = 'scratch operand']
  %s0 = inlined_call_operand.vmem [shape: f32[2,8], index: 0, kind: input, shape index: {}]
  %s1 = inlined_call_operand.vmem [shape: f32[2,8], index: 1, kind: input, shape index: {}]
  %s2 = inlined_call_operand.vmem [shape: f32[32,20], index: 2, kind: input, shape index: {}]
  %s3 = inlined_call_operand.vmem [shape: f32[32,24], index: 3, kind: input, shape index: {}]
  %s4 = inlined_call_operand.hbm [shape: f32[1,128], index: 4, kind: output, shape index: {0}]
  %s5 = inlined_call_operand.hbm [shape: f32[1,128], index: 5, kind: output, shape index: {1}]
  %6 = xla_tuple %s4, %s5
  %s7 = sld [smem:[#allocation0]]
  $region46: #{tpu_custom_call.1} parent=0
    _
  %s9 = ssub.s32 1, %s7
  %s10 = scalar_select 0, %s9, %s7
  $region1: #{tpu_custom_call.1} parent=0
    #allocation3 [shape = 'u8[512]{0}', space=vmem, size = 0x400, scoped, tag = 'output window, operand 0, single buffered']
    #allocation4 [shape = 's32[1]{0}', space=sflag, size = 0x4, scoped, tag = 'scoped memory for tpu_custom_call.1']
    #allocation5 [shape = 'u8[512]{0}', space=vmem, size = 0x400, scoped, tag = 'output window, operand 1, single buffered']
    #allocation6 [shape = 's32[1]{0}', space=sflag, size = 0x4, scoped, tag = 'scoped memory for tpu_custom_call.1']
    %11 = vsyncpa [#allocation4], 0
    %12 = vsyncpa [#allocation6], 0
    // Predicated region
    $region2: #{tpu_custom_call.1} parent=1 // pred_check
      _
    $region3: #{tpu_custom_call.1} parent=1 // pred_check_branch
      %14 = sbr.rel (0) target = $region5
    $region4: #{tpu_custom_call.1} parent=1 // pred_region
      _
    $region5: #{tpu_custom_call.1} parent=1 // pred_fallthru
      _
    // Predicated region
    $region6: #{tpu_custom_call.1} parent=1 // pred_check
      _
    $region7: #{tpu_custom_call.1} parent=1 // pred_check_branch
      %16 = sbr.rel (0) target = $region9
    $region8: #{tpu_custom_call.1} parent=1 // pred_region
      _
    $region9: #{tpu_custom_call.1} parent=1 // pred_fallthru
      _
    // Predicated region
    $region10: #{tpu_custom_call.1} parent=1 // pred_check
      _
    $region11: #{tpu_custom_call.1} parent=1 // pred_check_branch
      %18 = sbr.rel (0) target = $region13
    $region12: #{tpu_custom_call.1} parent=1 // pred_region
      %s19 = sadd.s32 0, 0
      %p20 = scmp.lt.s32.totalorder %s19, 0
      %s21 = scalar_select %p20, %s19, 0
      %s22 = smul.u32 4, %s21
      %p23 = scmp.lt.s32.totalorder %s22, 3
      %s24 = scalar_select %p23, %s22, 3
      %s25 = smul.addr %s24, 8
      %s26 = scalar_lea.vmem %s2, %s25
      %s27 = sadd.s32 0, 0
      %p28 = scmp.lt.s32.totalorder %s27, 0
      %s29 = scalar_select %p28, %s27, 0
      %s30 = smul.u32 4, %s29
    $region13: #{tpu_custom_call.1} parent=1 // pred_fallthru
      _
    // Predicated region
    $region14: #{tpu_custom_call.1} parent=1 // pred_check
      _
    $region15: #{tpu_custom_call.1} parent=1 // pred_check_branch
      %32 = sbr.rel (0) target = $region17
    $region16: #{tpu_custom_call.1} parent=1 // pred_region
      %s33 = sadd.s32 0, 0
      %p34 = scmp.lt.s32.totalorder %s33, 0
      %s35 = scalar_select %p34, %s33, 0
      %s36 = smul.u32 4, %s35
      %p37 = scmp.lt.s32.totalorder %s36, 3
      %s38 = scalar_select %p37, %s36, 3
      %s39 = smul.addr %s38, 8
      %s40 = scalar_lea.vmem %s3, %s39
      %s41 = sadd.s32 0, 0
      %p42 = scmp.lt.s32.totalorder %s41, 0
      %s43 = scalar_select %p42, %s41, 0
      %s44 = smul.u32 4, %s43
    $region17: #{tpu_custom_call.1} parent=1 // pred_fallthru
      _
    %s45 = sadd.s32 0, 0
    %p46 = scmp.lt.s32.totalorder %s45, 0
    %s47 = scalar_select %p46, %s45, 0
    %s48 = smul.u32 4, %s47
    %p49 = scmp.lt.s32.totalorder %s48, 3
    %s50 = scalar_select %p49, %s48, 3
    %s51 = smul.addr %s50, 8
    %s52 = scalar_lea.vmem %s2, %s51
    %s53 = sadd.s32 0, 0
    %p54 = scmp.lt.s32.totalorder %s53, 0
    %s55 = scalar_select %p54, %s53, 0
    %s56 = smul.u32 4, %s55
    %p57 = scmp.lt.s32.totalorder %s56, 3
    %s58 = scalar_select %p57, %s56, 3
    %s59 = smul.addr %s58, 8
    %s60 = scalar_lea.vmem %s3, %s59
    %s61 = sadd.s32 0, 0
    %p62 = scmp.lt.s32.totalorder %s61, 0
    %s63 = scalar_select %p62, %s61, 0
    %s64 = smul.u32 4, %s63
    %p65 = scmp.lt.s32.totalorder %s64, 3
    %s66 = scalar_select %p65, %s64, 3
    %s67 = smul.addr %s66, 8
    %s68 = scalar_lea.vmem %s2, %s67
    %s69 = sadd.s32 0, 0
    %p70 = scmp.lt.s32.totalorder %s69, 0
    %s71 = scalar_select %p70, %s69, 0
    %s72 = smul.u32 4, %s71
    %s73 = sadd.s32 0, 0
    %p74 = scmp.lt.s32.totalorder %s73, 0
    %s75 = scalar_select %p74, %s73, 0
    %s76 = smul.u32 4, %s75
    %p77 = scmp.lt.s32.totalorder %s76, 3
    %s78 = scalar_select %p77, %s76, 3
    %s79 = smul.addr %s78, 8
    %s80 = scalar_lea.vmem %s3, %s79
    %s81 = sadd.s32 0, 0
    %p82 = scmp.lt.s32.totalorder %s81, 0
    %s83 = scalar_select %p82, %s81, 0
    %s84 = smul.u32 4, %s83
    %p85 = scmp.eq.s32.totalorder 0, 0
    %p86 = scmp.eq.s32.totalorder 0, 0
    %p87 = pnand %p85, %p86
    %p88 = pneg %p87
    // Predicated region
    $region18: #{tpu_custom_call.1} parent=1 // pred_check
      _
    $region19: #{tpu_custom_call.1} parent=1 // pred_check_branch
      %90 = sbr.rel (%p87) target = $region21
    $region20: #{tpu_custom_call.1} parent=1 // pred_region
      %91 = vst [vmem:[#allocation3] sm:$0x1] 0.0
      %92 = vst [vmem:[#allocation5] sm:$0x1] 0.0
      %vm93 = vcmask 162816
      %94 = vst.msk [vmem:[#allocation2] sm:$0xff] %vm93, 0.0
      %95 = vst.msk [vmem:[#allocation2 + $0x8] sm:$0xff] %vm93, 0.0
      %96 = vst.msk [vmem:[#allocation2 + $0x10] sm:$0xff] %vm93, 0.0
      %97 = vst.msk [vmem:[#allocation2 + $0x18] sm:$0xff] %vm93, 0.0
    $region21: #{tpu_custom_call.1} parent=1 // pred_fallthru
      _
    %p98 = scmp.eq.s32.totalorder 0, 0
    %p99 = pnand %p88, %p98
    %p100 = pneg %p99
    // Predicated region
    $region22: #{tpu_custom_call.1} parent=1 // pred_check
      _
    $region23: #{tpu_custom_call.1} parent=1 // pred_check_branch
      %102 = sbr.rel (%p99) target = $region25
    $region24: #{tpu_custom_call.1} parent=1 // pred_region
      %v103 = vld [vmem:[%s0] sm:$0x3]
      %v104 = vld [vmem:[%s1] sm:$0x3]
      %v105 = vsub.f32 %v103, %v104
      %v106 = vld [vmem:[#allocation3] sm:$0x1]
      %v107 = vmul.f32 %v105, %v105
      %vm108 = vcmask 58368
      %v109 = vsel %vm108, %v107, 0.0
      %110 = vadd.xlane.f32.xlu0 %v109
      %v111 = vpop.xlane.xlu0 %110
      %v112 = vrot.slane %v111, 4
      %v113 = vadd.f32 %v111, %v112
      %v114 = vrot.slane %v113, 2
      %v115 = vadd.f32 %v113, %v114
      %v116 = vrot.slane %v115, 1
      %v117 = vadd.f32 %v115, %v116
      %s118 = vtos %v117
      %v119 = vstv %s118
      %v120 = vadd.f32 %v106, %v119
      %121 = vst [vmem:[#allocation3] sm:$0x1] %v120
    $region25: #{tpu_custom_call.1} parent=1 // pred_fallthru
      _
    %v122 = vld [vmem:[%s68] sm:$0xff]
    %v123 = vld [vmem:[%s68 + $0x8] sm:$0xff]
    %v124 = vld [vmem:[%s68 + $0x10] sm:$0xff]
    %v125 = vld [vmem:[%s68 + $0x18] sm:$0xff]
    %v126 = vld [vmem:[%s80] sm:$0xff]
    %v127 = vld [vmem:[%s80 + $0x8] sm:$0xff]
    %v128 = vld [vmem:[%s80 + $0x10] sm:$0xff]
    %v129 = vld [vmem:[%s80 + $0x18] sm:$0xff]
    %v130 = vsub.f32 %v122, %v126
    %v131 = vsub.f32 %v123, %v127
    %v132 = vsub.f32 %v124, %v128
    %v133 = vsub.f32 %v125, %v129
    %v134 = vmul.f32 %v130, %v130
    %v135 = vmul.f32 %v131, %v131
    %v136 = vmul.f32 %v132, %v132
    %v137 = vmul.f32 %v133, %v133
    %v138 = vld [vmem:[#allocation2] sm:$0xff]
    %v139 = vld [vmem:[#allocation2 + $0x8] sm:$0xff]
    %v140 = vld [vmem:[#allocation2 + $0x10] sm:$0xff]
    %v141 = vld [vmem:[#allocation2 + $0x18] sm:$0xff]
    %v142 = vadd.f32 %v138, %v134
    %v143 = vadd.f32 %v139, %v135
    %v144 = vadd.f32 %v140, %v136
    %v145 = vadd.f32 %v141, %v137
    %vm146 = vcmask 162816
    %147 = vst.msk [vmem:[#allocation2] sm:$0xff] %vm146, %v142
    %148 = vst.msk [vmem:[#allocation2 + $0x8] sm:$0xff] %vm146, %v143
    %149 = vst.msk [vmem:[#allocation2 + $0x10] sm:$0xff] %vm146, %v144
    %150 = vst.msk [vmem:[#allocation2 + $0x18] sm:$0xff] %vm146, %v145
    // Predicated region
    $region26: #{tpu_custom_call.1} parent=1 // pred_check
      _
    $region27: #{tpu_custom_call.1} parent=1 // pred_check_branch
      %152 = sbr.rel (%p87) target = $region29
    $region28: #{tpu_custom_call.1} parent=1 // pred_region
      %v153 = vld [vmem:[#allocation5] sm:$0x1]
      %v154 = vld [vmem:[#allocation2] sm:$0xff]
      %v155 = vld [vmem:[#allocation2 + $0x8] sm:$0xff]
      %v156 = vld [vmem:[#allocation2 + $0x10] sm:$0xff]
      %v157 = vld [vmem:[#allocation2 + $0x18] sm:$0xff]
      %v158 = vsel %vm146, %v154, 0.0
      %v159 = vsel %vm146, %v155, 0.0
      %v160 = vadd.f32 %v158, %v159
      %v161 = vsel %vm146, %v156, 0.0
      %v162 = vadd.f32 %v160, %v161
      %v163 = vsel %vm146, %v157, 0.0
      %v164 = vadd.f32 %v162, %v163
      %165 = vadd.xlane.f32.xlu0 %v164
      %v166 = vpop.xlane.xlu0 %165
      %v167 = vrot.slane %v166, 4
      %v168 = vadd.f32 %v166, %v167
      %v169 = vrot.slane %v168, 2
      %v170 = vadd.f32 %v168, %v169
      %v171 = vrot.slane %v170, 1
      %v172 = vadd.f32 %v170, %v171
      %s173 = vtos %v172
      %v174 = vstv %s173
      %v175 = vadd.f32 %v153, %v174
      %176 = vst [vmem:[#allocation5] sm:$0x1] %v175
    $region29: #{tpu_custom_call.1} parent=1 // pred_fallthru
      _
    // Predicated region
    $region30: #{tpu_custom_call.1} parent=1 // pred_check
      _
    $region31: #{tpu_custom_call.1} parent=1 // pred_check_branch
      %178 = sbr.rel (0) target = $region33
    $region32: #{tpu_custom_call.1} parent=1 // pred_region
      %s180 = ssub.s32 16, 16
      %181 = vsyncadd [#allocation4], %s180
      %s183 = sshll.u32 [#allocation3], 4
      %s184 = int_to_ptr.vmem [resolvable:$true] %s183
      %186 = dma.vmem_to_hbm [thread:$0]  %s184, 16, %s4, [#allocation4]
    $region33: #{tpu_custom_call.1} parent=1 // pred_fallthru
      _
    // Predicated region
    $region34: #{tpu_custom_call.1} parent=1 // pred_check
      _
    $region35: #{tpu_custom_call.1} parent=1 // pred_check_branch
      %188 = sbr.rel (0) target = $region37
    $region36: #{tpu_custom_call.1} parent=1 // pred_region
      %s190 = ssub.s32 16, 16
      %191 = vsyncadd [#allocation6], %s190
      %s193 = sshll.u32 [#allocation5], 4
      %s194 = int_to_ptr.vmem [resolvable:$true] %s193
      %196 = dma.vmem_to_hbm [thread:$0]  %s194, 16, %s5, [#allocation6]
    $region37: #{tpu_custom_call.1} parent=1 // pred_fallthru
      _
    // Predicated region
    $region38: #{tpu_custom_call.1} parent=1 // pred_check
      _
    $region39: #{tpu_custom_call.1} parent=1 // pred_check_branch
      %198 = sbr.rel (0) target = $region41
    $region40: #{tpu_custom_call.1} parent=1 // pred_region
      %199 = dma.done [#allocation4], 16
    $region41: #{tpu_custom_call.1} parent=1 // pred_fallthru
      _
    // Predicated region
    $region42: #{tpu_custom_call.1} parent=1 // pred_check
      _
    $region43: #{tpu_custom_call.1} parent=1 // pred_check_branch
      %201 = sbr.rel (0) target = $region45
    $region44: #{tpu_custom_call.1} parent=1 // pred_region
      %202 = dma.done [#allocation6], 16
    $region45: #{tpu_custom_call.1} parent=1 // pred_fallthru
      _
    %203 = vsyncpa [#allocation4], 1
    %204 = vsyncpa [#allocation6], 1

</llo_original>
